<compile_context>
chip_gen: v5e
topology: v5e:2x2
jax: 0.10.0
libtpu: 0.0.40
codegen_flags: <defaults>
</compile_context>

<pallas_src>
import functools

import jax
import jax.numpy as jnp
from jax import lax
from jax.experimental import pallas as pl
from jax.experimental.pallas import tpu as pltpu

_LANES = 128                      # vreg lane width
_VMEM_LIMIT = 32 * 1024 * 1024    # safe on v5e/v6e/v7x with these tile sizes


def _cdiv(a, b):
    return (a + b - 1) // b


def _round_up(x, m):
    return ((x + m - 1) // m) * m


def _focal_core(p, t, alpha, gamma, binary_targets):
    """Elementwise focal-loss math in f32 (PyTorch BCE semantics)."""
    p = p.astype(jnp.float32)
    t = t.astype(jnp.float32)
    p_t = p * t + (1.0 - p) * (1.0 - t)
    if binary_targets:
        # Hard 0/1 targets: bce == -log(p_t), one EUP log instead of two.
        bce = -jnp.maximum(jnp.log(p_t), -100.0)
    else:
        # PyTorch clamps each log term at -100 BEFORE weighting by t / (1-t);
        # this ordering also keeps the (pred=1, target=1) padding exactly 0.
        log_p = jnp.maximum(jnp.log(p), -100.0)
        log_1mp = jnp.maximum(jnp.log(1.0 - p), -100.0)
        bce = -(t * log_p + (1.0 - t) * log_1mp)

    one_minus_pt = 1.0 - p_t
    g = float(gamma)
    if g == int(g) and int(g) >= 0:
        # Integer gamma (default 2.0): pure VPU multiplies, no EUP pow.
        ig = int(g)
        if ig == 0:
            fw = jnp.ones_like(one_minus_pt)
        else:
            fw = one_minus_pt
            for _ in range(ig - 1):
                fw = fw * one_minus_pt
    else:
        fw = one_minus_pt ** g
    return (alpha * fw) * bce


def _focal_reduce_kernel(pred_ref, tgt_ref, out_ref, acc_ref, *, alpha, gamma,
                         binary_targets, inv_divisor, tile_r, num_tiles,
                         inner_tiles, tail_rows, grid_p):
    p = pl.program_id(0)   # parallel chunk (<= 2, one per TensorCore on v7x)
    i = pl.program_id(1)   # row-tile within the chunk (reduction axis)

    @pl.when(i == 0)
    def _init():
        acc_ref[...] = jnp.zeros_like(acc_ref)

    g = p * inner_tiles + i   # global row-tile index

    def tile_partial(valid_rows):
        loss = _focal_core(pred_ref[...], tgt_ref[...], alpha, gamma,
                           binary_targets)
        if valid_rows is not None:
            # Mask rows past the data boundary of the last (partial) tile.
            row = lax.broadcasted_iota(jnp.int32, loss.shape, 0)
            loss = jnp.where(row < valid_rows, loss, 0.0)
        r = loss.shape[0]
        if r % 8 == 0 and r > 8:
            # In-tile partial reduction: r/8 plain VPU vreg adds -> (8, 128);
            # keeps the persistent accumulator at a single vreg of f32.
            loss = loss.reshape(r // 8, 8, _LANES).sum(axis=0)
        return loss

    full_tail = (tail_rows == tile_r)
    has_overflow = (grid_p * inner_tiles != num_tiles)

    if full_tail and not has_overflow:
        acc_ref[...] += tile_partial(None)
    else:
        @pl.when(g < num_tiles - 1)
        def _full():
            acc_ref[...] += tile_partial(None)

        @pl.when(g == num_tiles - 1)
        def _tail():
            acc_ref[...] += tile_partial(None if full_tail else tail_rows)
        # g >= num_tiles: clamped duplicate step (odd tile count), contributes
        # nothing.

    @pl.when(i == inner_tiles - 1)
    def _finalize():
        # Single cross-lane reduction + scalar multiply, once per chunk.
        total = jnp.sum(acc_ref[...]) * inv_divisor
        out_ref[...] = jnp.broadcast_to(total, out_ref.shape)


def _focal_elementwise_kernel(pred_ref, tgt_ref, out_ref, *, alpha, gamma,
                              binary_targets):
    out_ref[...] = _focal_core(pred_ref[...], tgt_ref[...], alpha, gamma,
                               binary_targets).astype(out_ref.dtype)


def _row_tiling(rows, tile_rows):
    """Pick a row-tile size: multiple of 32 (covers f32/bf16/int8 sublane
    packing), big enough to amortize per-step overhead, small single
    full-extent block for tiny inputs."""
    tile_cap = max(32, _round_up(int(tile_rows), 32))
    if rows > tile_cap:
        tile_r = tile_cap
    elif rows >= 64:
        # Split into (at least) two tiles so the DMA pipeline and the second
        # TensorCore (v7x) both have work.
        tile_r = _round_up(_cdiv(rows, 2), 32)
    else:
        tile_r = rows   # single full-extent block; no alignment constraint
    return tile_r, _cdiv(rows, tile_r)


def _lane_dense(x, rows, pad_value):
    """(B, C) -> (rows, 128).  Free reshape when B*C == rows*128; otherwise a
    minimal sentinel pad (unavoidable copy for a lane-dense layout)."""
    n = x.size
    if n == rows * _LANES:
        return x.reshape(rows, _LANES)
    flat = x.reshape(-1)
    pad = rows * _LANES - n
    flat = jnp.concatenate(
        [flat, jnp.full((pad,), pad_value, dtype=flat.dtype)])
    return flat.reshape(rows, _LANES)


def multi_label_focal_loss(predictions, targets, *, alpha=0.25, gamma=2.0,
                           reduction="mean", binary_targets=False,
                           tile_rows=2048, out_dtype=jnp.float32):
    """Pallas-TPU equivalent of MultiLabelFocalLoss.forward.

    `predictions` / `targets` are used at their given dtypes (bf16 preds and
    bf16/int targets halve HBM traffic); math is f32 inside the kernel.
    `binary_targets=True` enables the single-log fast path (hard 0/1 targets
    only).
    """
    assert predictions.ndim == 2 and predictions.shape == targets.shape
    B, C = predictions.shape
    n = B * C
    alpha = float(alpha)
    gamma = float(gamma)

    if reduction in ("mean", "sum"):
        rows = max(_cdiv(n, _LANES), 1)
        # (pred=1, target=1) padding -> bce = 0, focal_weight = 0: exact zero.
        pred2d = _lane_dense(predictions, rows, 1.0)
        tgt2d = _lane_dense(targets, rows, 1.0)

        tile_r, num_tiles = _row_tiling(rows, tile_rows)
        grid_p = 2 if num_tiles >= 2 else 1   # 2 TCs on v7x; harmless elsewhere
        inner_tiles = _cdiv(num_tiles, grid_p)
        tail_rows = rows - (num_tiles - 1) * tile_r
        acc_rows = 8 if tile_r % 8 == 0 else tile_r

        if grid_p * inner_tiles == num_tiles:
            row_map = lambda p, i: (p * inner_tiles + i, 0)
        else:
            # Odd tile count split across 2 chunks: clamp so no block starts
            # out of bounds; the kernel skips the duplicated step.
            row_map = lambda p, i: (
                jnp.minimum(p * inner_tiles + i, num_tiles - 1), 0)

        divisor = float(n) if reduction == "mean" else 1.0
        kernel = functools.partial(
            _focal_reduce_kernel, alpha=alpha, gamma=gamma,
            binary_targets=bool(binary_targets), inv_divisor=1.0 / divisor,
            tile_r=tile_r, num_tiles=num_tiles, inner_tiles=inner_tiles,
            tail_rows=tail_rows, grid_p=grid_p)

        tile_spec = pl.BlockSpec((tile_r, _LANES), row_map)
        partials = pl.pallas_call(
            kernel,
            out_shape=jax.ShapeDtypeStruct((1, grid_p * _LANES), jnp.float32),
            grid=(grid_p, inner_tiles),
            in_specs=[tile_spec, tile_spec],
            out_specs=pl.BlockSpec((1, _LANES), lambda p, i: (0, p)),
            scratch_shapes=[pltpu.VMEM((acc_rows, _LANES), jnp.float32)],
            compiler_params=pltpu.CompilerParams(
                dimension_semantics=("parallel", "arbitrary"),
                vmem_limit_bytes=_VMEM_LIMIT),
        )(pred2d, tgt2d)
        # One (broadcast) partial per chunk; add them (already scaled by 1/div).
        return jnp.sum(partials.reshape(grid_p, _LANES)[:, 0])

    # ----- reduction == 'none' (or anything else, per the PyTorch module) ---
    kernel = functools.partial(
        _focal_elementwise_kernel, alpha=alpha, gamma=gamma,
        binary_targets=bool(binary_targets))
    params = pltpu.CompilerParams(dimension_semantics=("parallel",),
                                  vmem_limit_bytes=_VMEM_LIMIT)

    if n % _LANES == 0:
        # Zero-copy lane-dense path.
        rows = n // _LANES
        tile_r, num_tiles = _row_tiling(rows, tile_rows)
        spec = pl.BlockSpec((tile_r, _LANES), lambda i: (i, 0))
        out2d = pl.pallas_call(
            kernel,
            out_shape=jax.ShapeDtypeStruct((rows, _LANES), out_dtype),
            grid=(num_tiles,),
            in_specs=[spec, spec],
            out_specs=spec,
            compiler_params=params,
        )(predictions.reshape(rows, _LANES), targets.reshape(rows, _LANES))
        return out2d.reshape(B, C)

    if C >= 32:
        # Non-128-aligned but decent lane utilisation: operate directly on
        # (tile_b, C) blocks (full trailing dim) -- no pad / un-pad passes.
        budget_rows = max(32, (int(tile_rows) * _LANES) // _round_up(C, _LANES))
        tile_b, num_b = _row_tiling(B, budget_rows)
        spec = pl.BlockSpec((tile_b, C), lambda i: (i, 0))
        return pl.pallas_call(
            kernel,
            out_shape=jax.ShapeDtypeStruct((B, C), out_dtype),
            grid=(num_b,),
            in_specs=[spec, spec],
            out_specs=spec,
            compiler_params=params,
        )(predictions, targets)

    # Tiny C (e.g. the module's C=5): lane-dense with a minimal sentinel pad
    # and an un-pad slice; the two extra passes beat wasting 123/128 lanes of
    # compute for large B.
    rows = _cdiv(n, _LANES)
    pred2d = _lane_dense(predictions, rows, 1.0)
    tgt2d = _lane_dense(targets, rows, 1.0)
    tile_r, num_tiles = _row_tiling(rows, tile_rows)
    spec = pl.BlockSpec((tile_r, _LANES), lambda i: (i, 0))
    out2d = pl.pallas_call(
        kernel,
        out_shape=jax.ShapeDtypeStruct((rows, _LANES), out_dtype),
        grid=(num_tiles,),
        in_specs=[spec, spec],
        out_specs=spec,
        compiler_params=params,
    )(pred2d, tgt2d)
    return out2d.reshape(-1)[:n].reshape(B, C)


def _reference_focal_loss(predictions, targets, alpha=0.25, gamma=2.0,
                          reduction="mean"):
    p = predictions.astype(jnp.float32)
    t = targets.astype(jnp.float32)
    log_p = jnp.maximum(jnp.log(p), -100.0)
    log_1mp = jnp.maximum(jnp.log(1.0 - p), -100.0)
    bce = -(t * log_p + (1.0 - t) * log_1mp)
    p_t = p * t + (1.0 - p) * (1.0 - t)
    focal = alpha * (1.0 - p_t) ** gamma * bce
    if reduction == "mean":
        return focal.mean()
    if reduction == "sum":
        return focal.sum()
    return focal


if __name__ == "__main__":
    key = jax.random.PRNGKey(0)
    k1, k2, k3, k4, k5, k6, k7, k8 = jax.random.split(key, 8)

    # 1) Module-sized case: [batch=8, classes=5], f32 (exercises the padded
    #    lane-dense reduce path and the tiny-C 'none' fallback).
    B, C = 8, 5
    preds = jax.nn.sigmoid(jax.random.normal(k1, (B, C), jnp.float32))
    tgts = (jax.random.uniform(k2, (B, C)) > 0.5).astype(jnp.float32)

    loss = jax.block_until_ready(multi_label_focal_loss(preds, tgts))
    ref = _reference_focal_loss(preds, tgts)
    assert jnp.allclose(loss, ref, rtol=1e-5, atol=1e-6), (loss, ref)

    loss_sum = jax.block_until_ready(
        multi_label_focal_loss(preds, tgts, reduction="sum"))
    ref_sum = _reference_focal_loss(preds, tgts, reduction="sum")
    assert jnp.allclose(loss_sum, ref_sum, rtol=1e-5, atol=1e-5), (loss_sum, ref_sum)

    elem = jax.block_until_ready(
        multi_label_focal_loss(preds, tgts, reduction="none"))
    assert elem.shape == (B, C)
    assert jnp.allclose(
        elem, _reference_focal_loss(preds, tgts, reduction="none"),
        rtol=1e-5, atol=1e-6)

    # 2) 128-aligned shape (zero-copy reshape), multi-tile + 2-way parallel
    #    reduction.
    B2, C2 = 64, 512
    preds2 = jax.nn.sigmoid(jax.random.normal(k3, (B2, C2), jnp.float32))
    tgts2 = (jax.random.uniform(k4, (B2, C2)) > 0.5).astype(jnp.float32)
    loss2 = jax.block_until_ready(
        multi_label_focal_loss(preds2, tgts2, reduction="mean", tile_rows=128))
    ref2 = _reference_focal_loss(preds2, tgts2)
    assert jnp.allclose(loss2, ref2, rtol=2e-4, atol=1e-6), (loss2, ref2)

    elem2 = jax.block_until_ready(
        multi_label_focal_loss(preds2, tgts2, reduction="none", tile_rows=128))
    assert jnp.allclose(
        elem2, _reference_focal_loss(preds2, tgts2, reduction="none"),
        rtol=1e-5, atol=1e-6)

    # 3) Ragged case: odd tile count + partial tail tile (exercises the
    #    index-map clamp and the in-kernel tail mask).
    B3, C3 = 100, 96           # n = 9600 -> rows = 75; tile_r = 32 -> 3 tiles
    preds3 = jax.nn.sigmoid(jax.random.normal(k5, (B3, C3), jnp.float32))
    tgts3 = (jax.random.uniform(k6, (B3, C3)) > 0.5).astype(jnp.float32)
    loss3 = jax.block_until_ready(
        multi_label_focal_loss(preds3, tgts3, reduction="mean", tile_rows=32))
    ref3 = _reference_focal_loss(preds3, tgts3)
    assert jnp.allclose(loss3, ref3, rtol=2e-4, atol=1e-6), (loss3, ref3)

    # 4) 'none' on a non-128-aligned shape with decent lane utilisation:
    #    direct (B, C) blocks, no pad / slice passes.
    B4, C4 = 20, 40
    preds4 = jax.nn.sigmoid(jax.random.normal(k7, (B4, C4), jnp.float32))
    tgts4 = (jax.random.uniform(k8, (B4, C4)) > 0.5).astype(jnp.float32)
    elem4 = jax.block_until_ready(
        multi_label_focal_loss(preds4, tgts4, reduction="none"))
    assert elem4.shape == (B4, C4)
    assert jnp.allclose(
        elem4, _reference_focal_loss(preds4, tgts4, reduction="none"),
        rtol=1e-5, atol=1e-6)

    # 5) bf16 inputs + binary-target single-log fast path (narrow-dtype HBM
    #    traffic + EUP savings).
    preds_bf16 = preds2.astype(jnp.bfloat16)
    tgts_bf16 = tgts2.astype(jnp.bfloat16)
    loss_fast = jax.block_until_ready(
        multi_label_focal_loss(preds_bf16, tgts_bf16, reduction="mean",
                               binary_targets=True))
    ref_fast = _reference_focal_loss(preds_bf16.astype(jnp.float32),
                                     tgts_bf16.astype(jnp.float32))
    assert jnp.allclose(loss_fast, ref_fast, rtol=1e-3, atol=1e-6), (loss_fast, ref_fast)

    print("KERNEL_OK")
</pallas_src>

<mosaic_0001>
module attributes {stable_mosaic.version = 11 : i64} {
  func.func @_focal_reduce_kernel(%arg0: i32, %arg1: i32, %arg2: memref<1x128xf32, #tpu.memory_space<vmem>>, %arg3: memref<1x128xf32, #tpu.memory_space<vmem>>, %arg4: memref<1x128xf32, #tpu.memory_space<vmem>>, %arg5: memref<1x128xf32, #tpu.memory_space<vmem>>) attributes {dimension_semantics = [#tpu.dimension_semantics<parallel>, #tpu.dimension_semantics<arbitrary>], iteration_bounds = array<i64: 1, 1>, scalar_prefetch = 0 : i64, scratch_operands = 1 : i64, tpu.core_type = #tpu.core_type<tc>, window_params = [{transform_indices = @transform_0, window_bounds = array<i64: 1, 128>}, {transform_indices = @transform_1, window_bounds = array<i64: 1, 128>}, {transform_indices = @transform_2, window_bounds = array<i64: 1, 128>}]} {
    %c0_i32 = arith.constant 0 : i32
    %0 = arith.cmpi eq, %arg1, %c0_i32 : i32
    %1 = arith.extui %0 : i1 to i32
    %c0_i32_0 = arith.constant 0 : i32
    %2 = arith.cmpi ne, %1, %c0_i32_0 : i32
    scf.if %2 {
      %cst_18 = arith.constant 0.000000e+00 : f32
      %39 = vector.broadcast %cst_18 : f32 to vector<1x128xf32>
      %c0_19 = arith.constant 0 : index
      %c0_20 = arith.constant 0 : index
      %40 = vector.load %arg5[%c0_19, %c0_20] : memref<1x128xf32, #tpu.memory_space<vmem>>, vector<1x128xf32>
      tpu.vector_store %arg5[%c0_19, %c0_20], %39 {strides = array<i32>} : memref<1x128xf32, #tpu.memory_space<vmem>>, vector<1x128xf32>,
    } else {
    }
    %c0 = arith.constant 0 : index
    %c0_1 = arith.constant 0 : index
    %3 = vector.load %arg5[%c0, %c0_1] : memref<1x128xf32, #tpu.memory_space<vmem>>, vector<1x128xf32>
    %c0_2 = arith.constant 0 : index
    %c0_3 = arith.constant 0 : index
    %4 = vector.load %arg2[%c0_2, %c0_3] : memref<1x128xf32, #tpu.memory_space<vmem>>, vector<1x128xf32>
    %c0_4 = arith.constant 0 : index
    %c0_5 = arith.constant 0 : index
    %5 = vector.load %arg3[%c0_4, %c0_5] : memref<1x128xf32, #tpu.memory_space<vmem>>, vector<1x128xf32>
    %6 = arith.mulf %4, %5 : vector<1x128xf32>
    %cst = arith.constant 1.000000e+00 : f32
    %7 = vector.broadcast %cst : f32 to vector<1x128xf32>
    %8 = arith.subf %7, %4 : vector<1x128xf32>
    %cst_6 = arith.constant 1.000000e+00 : f32
    %9 = vector.broadcast %cst_6 : f32 to vector<1x128xf32>
    %10 = arith.subf %9, %5 : vector<1x128xf32>
    %11 = arith.mulf %8, %10 : vector<1x128xf32>
    %12 = arith.addf %6, %11 : vector<1x128xf32>
    %13 = math.log %4 : vector<1x128xf32>
    %cst_7 = arith.constant -1.000000e+02 : f32
    %14 = vector.broadcast %cst_7 : f32 to vector<1x128xf32>
    %15 = arith.maximumf %13, %14 : vector<1x128xf32>
    %cst_8 = arith.constant 1.000000e+00 : f32
    %16 = vector.broadcast %cst_8 : f32 to vector<1x128xf32>
    %17 = arith.subf %16, %4 : vector<1x128xf32>
    %18 = math.log %17 : vector<1x128xf32>
    %cst_9 = arith.constant -1.000000e+02 : f32
    %19 = vector.broadcast %cst_9 : f32 to vector<1x128xf32>
    %20 = arith.maximumf %18, %19 : vector<1x128xf32>
    %21 = arith.mulf %5, %15 : vector<1x128xf32>
    %cst_10 = arith.constant 1.000000e+00 : f32
    %22 = vector.broadcast %cst_10 : f32 to vector<1x128xf32>
    %23 = arith.subf %22, %5 : vector<1x128xf32>
    %24 = arith.mulf %23, %20 : vector<1x128xf32>
    %25 = arith.addf %21, %24 : vector<1x128xf32>
    %cst_11 = arith.constant 0.000000e+00 : f32
    %26 = vector.broadcast %cst_11 : f32 to vector<1x128xf32>
    %27 = arith.subf %26, %25 : vector<1x128xf32>
    %cst_12 = arith.constant 1.000000e+00 : f32
    %28 = vector.broadcast %cst_12 : f32 to vector<1x128xf32>
    %29 = arith.subf %28, %12 : vector<1x128xf32>
    %30 = arith.mulf %29, %29 : vector<1x128xf32>
    %cst_13 = arith.constant 2.500000e-01 : f32
    %31 = vector.broadcast %cst_13 : f32 to vector<1x128xf32>
    %32 = arith.mulf %31, %30 : vector<1x128xf32>
    %33 = arith.mulf %32, %27 : vector<1x128xf32>
    %34 = arith.addf %3, %33 : vector<1x128xf32>
    %c0_14 = arith.constant 0 : index
    %c0_15 = arith.constant 0 : index
    %35 = vector.load %arg5[%c0_14, %c0_15] : memref<1x128xf32, #tpu.memory_space<vmem>>, vector<1x128xf32>
    tpu.vector_store %arg5[%c0_14, %c0_15], %34 {strides = array<i32>} : memref<1x128xf32, #tpu.memory_space<vmem>>, vector<1x128xf32>,
    %c0_i32_16 = arith.constant 0 : i32
    %36 = arith.cmpi eq, %arg1, %c0_i32_16 : i32
    %37 = arith.extui %36 : i1 to i32
    %c0_i32_17 = arith.constant 0 : i32
    %38 = arith.cmpi ne, %37, %c0_i32_17 : i32
    scf.if %38 {
      %c0_18 = arith.constant 0 : index
      %c0_19 = arith.constant 0 : index
      %39 = vector.load %arg5[%c0_18, %c0_19] : memref<1x128xf32, #tpu.memory_space<vmem>>, vector<1x128xf32>
      %40 = vector.shape_cast %39 : vector<1x128xf32> to vector<1x1x128xf32>
      %cst_20 = arith.constant dense<0.000000e+00> : vector<1xf32>
      %41 = vector.multi_reduction <add>, %40, %cst_20 [1, 2] : vector<1x1x128xf32> to vector<1xf32>
      %42 = vector.shape_cast %41 : vector<1xf32> to vector<1x1x1xf32>
      %43 = vector.extract %42[0, 0, 0] : f32 from vector<1x1x1xf32>
      %cst_21 = arith.constant 2.500000e-02 : f32
      %44 = arith.mulf %43, %cst_21 : f32
      %45 = vector.broadcast %44 : f32 to vector<1x128xf32>
      %c0_22 = arith.constant 0 : index
      %c0_23 = arith.constant 0 : index
      %46 = vector.load %arg4[%c0_22, %c0_23] : memref<1x128xf32, #tpu.memory_space<vmem>>, vector<1x128xf32>
      tpu.vector_store %arg4[%c0_22, %c0_23], %45 {strides = array<i32>} : memref<1x128xf32, #tpu.memory_space<vmem>>, vector<1x128xf32>,
    } else {
    }
    return
  }
  func.func @transform_0(%arg0: i32, %arg1: i32) -> (i32, i32) {
    %c1_i32 = arith.constant 1 : i32
    %0 = arith.muli %arg0, %c1_i32 : i32
    %1 = arith.addi %0, %arg1 : i32
    %c0_i32 = arith.constant 0 : i32
    %c0_i32_0 = arith.constant 0 : i32
    return %1, %c0_i32 : i32, i32
  }
  func.func @transform_1(%arg0: i32, %arg1: i32) -> (i32, i32) {
    %c1_i32 = arith.constant 1 : i32
    %0 = arith.muli %arg0, %c1_i32 : i32
    %1 = arith.addi %0, %arg1 : i32
    %c0_i32 = arith.constant 0 : i32
    %c0_i32_0 = arith.constant 0 : i32
    return %1, %c0_i32 : i32, i32
  }
  func.func @transform_2(%arg0: i32, %arg1: i32) -> (i32, i32) {
    %c0_i32 = arith.constant 0 : i32
    %c0_i32_0 = arith.constant 0 : i32
    return %c0_i32, %arg0 : i32, i32
  }
}

</mosaic_0001>

<llo_original>
// kernel: tpu_custom_call.1
$region0: #{tpu_custom_call.1}
  #allocation0 [shape = 'u32[]', space=smem, size = 0x4, offset = 0x4, fixed_abs, tag = 'smem constant byte address 0x4 - core index']
  #allocation1 [shape = 'u32[72,128]{1,0:T(1,128)}', space=vmem, size = 0x9000, scoped, tag = 'internal scratch']
  #allocation2 [shape = 'f32[1,128]{1,0:T(1,128)}', space=vmem, size = 0x200, scoped, tag = 'scratch operand']
  %s0 = inlined_call_operand.hbm [shape: f32[1,128], index: 0, kind: input, shape index: {}]
  %s1 = inlined_call_operand.hbm [shape: f32[1,128], index: 1, kind: input, shape index: {}]
  %s2 = inlined_call_operand.hbm [shape: f32[1,128], index: 2, kind: output, shape index: {}]
  %s3 = sld [smem:[#allocation0]]
  $region34: #{tpu_custom_call.1} parent=0
    _
  %s5 = ssub.s32 1, %s3
  %s6 = scalar_select 0, %s5, %s3
  $region1: #{tpu_custom_call.1} parent=0
    #allocation3 [shape = 'u8[512]{0}', space=vmem, size = 0x400, scoped, tag = 'input window, operand 0, single buffered']
    #allocation4 [shape = 's32[1]{0}', space=sflag, size = 0x4, scoped, tag = 'scoped memory for tpu_custom_call.1']
    #allocation5 [shape = 's32[1]{0}', space=sflag, size = 0x4, scoped, tag = 'scoped memory for tpu_custom_call.1']
    #allocation6 [shape = 'u8[512]{0}', space=vmem, size = 0x400, scoped, tag = 'input window, operand 1, single buffered']
    #allocation7 [shape = 's32[1]{0}', space=sflag, size = 0x4, scoped, tag = 'scoped memory for tpu_custom_call.1']
    #allocation8 [shape = 'u8[512]{0}', space=vmem, size = 0x400, scoped, tag = 'output window, operand 0, single buffered']
    %7 = vsyncpa [#allocation4], 0
    %8 = vsyncpa [#allocation7], 0
    %9 = vsyncpa [#allocation5], 0
    // Predicated region
    $region2: #{tpu_custom_call.1} parent=1 // pred_check
      _
    $region3: #{tpu_custom_call.1} parent=1 // pred_check_branch
      %11 = sbr.rel (0) target = $region5
    $region4: #{tpu_custom_call.1} parent=1 // pred_region
      %s12 = sadd.s32 0, 0
      %14 = vsyncadd [#allocation4], 0
      %s15 = scalar_lea.hbm %s0, %s12
      %s17 = sshll.u32 %s15, 4
      %s18 = int_to_ptr.hbm [resolvable:$true] %s17
      %s19 = sshll.u32 [#allocation3], 4
      %s20 = int_to_ptr.vmem [resolvable:$true] %s19
      %22 = dma.hbm_to_vmem [thread:$0]  %s18, 16, %s20, [#allocation4]
    $region5: #{tpu_custom_call.1} parent=1 // pred_fallthru
      _
    // Predicated region
    $region6: #{tpu_custom_call.1} parent=1 // pred_check
      _
    $region7: #{tpu_custom_call.1} parent=1 // pred_check_branch
      %24 = sbr.rel (0) target = $region9
    $region8: #{tpu_custom_call.1} parent=1 // pred_region
      %s25 = sadd.s32 0, 0
      %27 = vsyncadd [#allocation7], 0
      %s28 = scalar_lea.hbm %s1, %s25
      %s30 = sshll.u32 %s28, 4
      %s31 = int_to_ptr.hbm [resolvable:$true] %s30
      %s32 = sshll.u32 [#allocation6], 4
      %s33 = int_to_ptr.vmem [resolvable:$true] %s32
      %35 = dma.hbm_to_vmem [thread:$0]  %s31, 16, %s33, [#allocation7]
    $region9: #{tpu_custom_call.1} parent=1 // pred_fallthru
      _
    // Predicated region
    $region10: #{tpu_custom_call.1} parent=1 // pred_check
      _
    $region11: #{tpu_custom_call.1} parent=1 // pred_check_branch
      %37 = sbr.rel (0) target = $region13
    $region12: #{tpu_custom_call.1} parent=1 // pred_region
      %39 = dma.done [#allocation4], 16
    $region13: #{tpu_custom_call.1} parent=1 // pred_fallthru
      _
    // Predicated region
    $region14: #{tpu_custom_call.1} parent=1 // pred_check
      _
    $region15: #{tpu_custom_call.1} parent=1 // pred_check_branch
      %41 = sbr.rel (0) target = $region17
    $region16: #{tpu_custom_call.1} parent=1 // pred_region
      %43 = dma.done [#allocation7], 16
    $region17: #{tpu_custom_call.1} parent=1 // pred_fallthru
      _
    %s44 = sadd.s32 0, 0
    %s45 = sadd.s32 0, 0
    %p46 = scmp.eq.s32.totalorder 0, 0
    // Predicated region
    $region18: #{tpu_custom_call.1} parent=1 // pred_check
      %p47 = pneg %p46
    $region19: #{tpu_custom_call.1} parent=1 // pred_check_branch
      %49 = sbr.rel (%p47) target = $region21
    $region20: #{tpu_custom_call.1} parent=1 // pred_region
      %50 = vst [vmem:[#allocation2] sm:$0x1] 0.0
    $region21: #{tpu_custom_call.1} parent=1 // pred_fallthru
      _
    %v51 = vld [vmem:[#allocation2] sm:$0x1]
    %v52 = vld [vmem:[#allocation3] sm:$0x1]
    %v53 = vld [vmem:[#allocation6] sm:$0x1]
    %v54 = vmul.f32 %v52, %v53
    %v55 = vsub.f32 1.0, %v52
    %v56 = vsub.f32 1.0, %v53
    %v57 = vmul.f32 %v55, %v56
    %v58 = vadd.f32 %v54, %v57
    %v59 = vlog2.pop %v52
    %v60 = vmul.f32 %v59, 0.6931472
    %v61 = vmax.f32 %v60, -100.0
    %v62 = vlog2.pop %v55
    %v63 = vmul.f32 %v62, 0.6931472
    %v64 = vmax.f32 %v63, -100.0
    %v65 = vmul.f32 %v53, %v61
    %v66 = vmul.f32 %v56, %v64
    %v67 = vadd.f32 %v65, %v66
    %v68 = vsub.f32 0.0, %v67
    %v69 = vsub.f32 1.0, %v58
    %v70 = vmul.f32 %v69, %v69
    %v71 = vmul.f32 %v70, 0.25
    %v72 = vmul.f32 %v71, %v68
    %v73 = vadd.f32 %v51, %v72
    %74 = vst [vmem:[#allocation2] sm:$0x1] %v73
    // Predicated region
    $region22: #{tpu_custom_call.1} parent=1 // pred_check
      %p75 = pneg %p46
    $region23: #{tpu_custom_call.1} parent=1 // pred_check_branch
      %77 = sbr.rel (%p75) target = $region25
    $region24: #{tpu_custom_call.1} parent=1 // pred_region
      %v78 = vld [vmem:[#allocation2] sm:$0x1]
      %vm79 = vcmask 1040384
      %v80 = vsel %vm79, %v78, 0.0
      %81 = vadd.xlane.f32.xlu0 %v80
      %v82 = vpop.xlane.xlu0 %81
      %v83 = vrot.slane %v82, 4
      %v84 = vadd.f32 %v82, %v83
      %v85 = vrot.slane %v84, 2
      %v86 = vadd.f32 %v84, %v85
      %v87 = vrot.slane %v86, 1
      %v88 = vadd.f32 %v86, %v87
      %s89 = vtos %v88
      %s90 = smul.f32 %s89, 0.025
      %v91 = vstv %s90
      %92 = vst [vmem:[#allocation8] sm:$0x1] %v91
    $region25: #{tpu_custom_call.1} parent=1 // pred_fallthru
      _
    // Predicated region
    $region26: #{tpu_custom_call.1} parent=1 // pred_check
      _
    $region27: #{tpu_custom_call.1} parent=1 // pred_check_branch
      %94 = sbr.rel (0) target = $region29
    $region28: #{tpu_custom_call.1} parent=1 // pred_region
      %96 = vsyncadd [#allocation5], 0
      %s98 = sshll.u32 [#allocation8], 4
      %s99 = int_to_ptr.vmem [resolvable:$true] %s98
      %s100 = sshll.u32 %s2, 4
      %s101 = int_to_ptr.hbm [resolvable:$true] %s100
      %103 = dma.vmem_to_hbm [thread:$0]  %s99, 16, %s101, [#allocation5]
    $region29: #{tpu_custom_call.1} parent=1 // pred_fallthru
      _
    // Predicated region
    $region30: #{tpu_custom_call.1} parent=1 // pred_check
      _
    $region31: #{tpu_custom_call.1} parent=1 // pred_check_branch
      %105 = sbr.rel (0) target = $region33
    $region32: #{tpu_custom_call.1} parent=1 // pred_region
      %107 = dma.done [#allocation5], 16
    $region33: #{tpu_custom_call.1} parent=1 // pred_fallthru
      _
    %108 = vsyncpa [#allocation4], 1
    %109 = vsyncpa [#allocation7], 1
    %110 = vsyncpa [#allocation5], 1

</llo_original>
